<compile_context>
chip_gen: v5e
topology: v5e:2x2
jax: 0.10.0
libtpu: 0.0.40
codegen_flags: <defaults>
</compile_context>

<pallas_src>
import jax
import jax.numpy as jnp
from jax.experimental import pallas as pl
from jax.experimental.pallas import tpu as pltpu


def _round_up(x, m):
    return (x + m - 1) // m * m


# ---------------------------------------------------------------------------
# Fused conv-as-GEMM + folded-BN + (residual) + (ReLU) Pallas kernel
# Single k step (full K per tile): dot -> f32 epilogue -> bf16 store.
# ---------------------------------------------------------------------------
def _make_fused_kernel(apply_relu, has_res):
    def kernel(*refs):
        if has_res:
            a_ref, b_ref, sb_ref, r_ref, o_ref = refs
        else:
            a_ref, b_ref, sb_ref, o_ref = refs
            r_ref = None
        # bf16 operands, f32 accumulation on the MXU (full K in one pass).
        acc = jnp.dot(a_ref[...], b_ref[...], preferred_element_type=jnp.float32)
        sb = sb_ref[...]                                  # (2, tn) f32
        y = acc * sb[0:1, :] + sb[1:2, :]                 # folded BN (f32)
        if r_ref is not None:
            y = y + r_ref[...].astype(jnp.float32)        # residual add (f32)
        if apply_relu:
            y = jnp.maximum(y, 0.0)
        o_ref[...] = y.astype(o_ref.dtype)                # bf16 writeback

    return kernel


def fused_matmul_bn(a, b, scale, bias, relu=True, residual=None):
    """(M,K)@(K,N) with per-column scale/bias (+residual)(+ReLU).

    Grid is (Mp//tm, Np//tn), both parallel; full K per step.  Output is bf16.
    """
    M, K = a.shape
    _, N = b.shape

    Kp = _round_up(K, 128)
    Np = _round_up(N, 128)
    Mp = _round_up(M, 16)                 # bf16 sublane packing
    tm = min(256, Mp)
    Mp = _round_up(Mp, tm)
    # Keep >= 2 parallel n-tiles on wide layers so v7x's two TensorCores both
    # get work; single big tile otherwise (best for single-TC v5e/v6e).
    if Np >= 256 and (Np // 2) % 128 == 0:
        tn = Np // 2
    else:
        tn = Np

    a_p = jnp.pad(a.astype(jnp.bfloat16), ((0, Mp - M), (0, Kp - K)))
    b_p = jnp.pad(b.astype(jnp.bfloat16), ((0, Kp - K), (0, Np - N)))
    sb = jnp.stack([scale.astype(jnp.float32), bias.astype(jnp.float32)])  # (2,N)
    sb_p = jnp.pad(sb, ((0, 0), (0, Np - N)))

    inputs = [a_p, b_p, sb_p]
    in_specs = [
        pl.BlockSpec((tm, Kp), lambda m, n: (m, 0)),
        pl.BlockSpec((Kp, tn), lambda m, n: (0, n)),
        pl.BlockSpec((2, tn), lambda m, n: (0, n)),
    ]
    has_res = residual is not None
    if has_res:
        # Residual stays bf16 (half the DMA bytes); upcast in the epilogue.
        r_p = jnp.pad(residual.astype(jnp.bfloat16), ((0, Mp - M), (0, Np - N)))
        inputs.append(r_p)
        in_specs.append(pl.BlockSpec((tm, tn), lambda m, n: (m, n)))

    out = pl.pallas_call(
        _make_fused_kernel(relu, has_res),
        out_shape=jax.ShapeDtypeStruct((Mp, Np), jnp.bfloat16),
        grid_spec=pltpu.PrefetchScalarGridSpec(
            num_scalar_prefetch=0,
            grid=(Mp // tm, Np // tn),
            in_specs=in_specs,
            out_specs=pl.BlockSpec((tm, tn), lambda m, n: (m, n)),
        ),
        # Worst-case per-step VMEM (layer4 conv2: B block 4608x256 bf16, double
        # buffered) is ~4.5 MiB -> default scoped VMEM is plenty on v5e/v6e/v7x.
        compiler_params=pltpu.CompilerParams(
            dimension_semantics=("parallel", "parallel"),
        ),
    )(*inputs)
    return out[:M, :N]


# ---------------------------------------------------------------------------
# im2col glue (plain JAX, bf16 patches) and conv+BN wrapper
# ---------------------------------------------------------------------------
# TODO(synk): im2col is still materialized host-side (XLA); an in-kernel gather
# over the kh*kw positions (extra k grid axis + Element offsets into the padded
# NHWC tensor) would remove the 9x HBM read amplification at real resolutions.
def _im2col(x, kh, kw, stride, pad):
    n, h, w, c = x.shape
    ho = (h + 2 * pad - kh) // stride + 1
    wo = (w + 2 * pad - kw) // stride + 1
    xp = jnp.pad(x, ((0, 0), (pad, pad), (pad, pad), (0, 0)))
    cols = []
    for i in range(kh):
        for j in range(kw):
            cols.append(xp[:, i:i + stride * ho:stride, j:j + stride * wo:stride, :])
    patches = jnp.stack(cols, axis=3)            # (n, ho, wo, kh*kw, c)
    return patches.reshape(n * ho * wo, kh * kw * c), ho, wo


def conv_bn(x, w, scale, bias, stride, pad, relu=True, residual=None):
    """x is NHWC bf16; returns NHWC bf16."""
    n = x.shape[0]
    kh, kw, cin, cout = w.shape
    if kh == 1 and kw == 1 and pad == 0:
        xs = x[:, ::stride, ::stride, :] if stride > 1 else x
        _, ho, wo, _ = xs.shape
        a = xs.reshape(n * ho * wo, cin)
    else:
        a, ho, wo = _im2col(x, kh, kw, stride, pad)
    b = w.reshape(kh * kw * cin, cout)
    res = None if residual is None else residual.reshape(-1, cout)
    y = fused_matmul_bn(a, b, scale, bias, relu=relu, residual=res)
    return y.reshape(n, ho, wo, cout)


# ---------------------------------------------------------------------------
# MaxPool 3x3/s2/p1 and global AvgPool as single-step whole-block Pallas kernels
# ---------------------------------------------------------------------------
def _maxpool_kernel(p_ref, o_ref):
    o_ref[...] = jnp.max(p_ref[...], axis=0)


def maxpool_3x3_s2(x):
    n, h, w, c = x.shape
    ho = (h + 2 - 3) // 2 + 1
    wo = (w + 2 - 3) // 2 + 1
    xp = jnp.pad(x, ((0, 0), (1, 1), (1, 1), (0, 0)),
                 constant_values=float("-inf"))
    cols = [xp[:, i:i + 2 * ho:2, j:j + 2 * wo:2, :]
            for i in range(3) for j in range(3)]
    M = n * ho * wo
    patches = jnp.stack(cols, axis=0).reshape(9, M, c)
    # Lane-dense output: fold pairs of rows into the 128-lane dim when c == 64
    # (avoids half-width masked vst.msk stores).
    if c * 2 == 128 and M % 2 == 0:
        patches = patches.reshape(9, M // 2, 2 * c)
    out = pl.pallas_call(
        _maxpool_kernel,
        out_shape=jax.ShapeDtypeStruct(patches.shape[1:], x.dtype),
    )(patches)
    return out.reshape(n, ho, wo, c)


def _avgpool_kernel(x_ref, o_ref):
    o_ref[...] = jnp.mean(x_ref[...].astype(jnp.float32), axis=1)


def global_avgpool(x):
    n, h, w, c = x.shape
    xr = x.reshape(n, h * w, c)
    return pl.pallas_call(
        _avgpool_kernel,
        out_shape=jax.ShapeDtypeStruct((n, c), jnp.float32),
    )(xr)


# ---------------------------------------------------------------------------
# Deterministic synthetic parameters (resnet18 shapes)
# ---------------------------------------------------------------------------
def init_conv(key, kh, kw, cin, cout):
    std = (2.0 / (kh * kw * cin)) ** 0.5
    return std * jax.random.normal(key, (kh, kw, cin, cout), jnp.float32)


def init_bn(key, c, eps=1e-5):
    k1, k2, k3, k4 = jax.random.split(key, 4)
    gamma = 1.0 + 0.1 * jax.random.normal(k1, (c,), jnp.float32)
    beta = 0.1 * jax.random.normal(k2, (c,), jnp.float32)
    mean = 0.05 * jax.random.normal(k3, (c,), jnp.float32)
    var = 1.0 + 0.1 * jax.random.uniform(k4, (c,), jnp.float32)
    scale = gamma / jnp.sqrt(var + eps)     # BN folded into scale/bias
    bias = beta - mean * scale
    return scale, bias


def init_basic_block(key, cin, cout, stride):
    ks = jax.random.split(key, 6)
    p = {
        "conv1": init_conv(ks[0], 3, 3, cin, cout),
        "bn1": init_bn(ks[1], cout),
        "conv2": init_conv(ks[2], 3, 3, cout, cout),
        "bn2": init_bn(ks[3], cout),
        "stride": stride,
    }
    if stride != 1 or cin != cout:
        p["down_conv"] = init_conv(ks[4], 1, 1, cin, cout)
        p["down_bn"] = init_bn(ks[5], cout)
    return p


def init_resnet18(key):
    ks = jax.random.split(key, 12)
    params = {
        "conv1": init_conv(ks[0], 7, 7, 3, 64),
        "bn1": init_bn(ks[1], 64),
        "layers": [],
    }
    cfg = [(64, 64, 1), (64, 128, 2), (128, 256, 2), (256, 512, 2)]
    ki = 2
    for cin, cout, stride in cfg:
        b0 = init_basic_block(ks[ki], cin, cout, stride); ki += 1
        b1 = init_basic_block(ks[ki], cout, cout, 1); ki += 1
        params["layers"].append([b0, b1])
    return params


# ---------------------------------------------------------------------------
# Forward pass (mirrors ResnetBase.forward, resnet18)
# NOTE: bf16 activations with f32 accumulation are a deliberate numerics change
# vs. the f32 PyTorch reference (~1e-2 relative error expected).
# ---------------------------------------------------------------------------
def basic_block_forward(x, p):
    stride = p["stride"]
    if "down_conv" in p:
        identity = conv_bn(x, p["down_conv"], *p["down_bn"],
                           stride=stride, pad=0, relu=False)
    else:
        identity = x
    out = conv_bn(x, p["conv1"], *p["bn1"], stride=stride, pad=1, relu=True)
    # conv2 -> bn2 -> +identity -> relu, all fused in one Pallas GEMM epilogue
    out = conv_bn(out, p["conv2"], *p["bn2"], stride=1, pad=1,
                  relu=True, residual=identity)
    return out


def resnet_base_forward(x_nchw, params):
    x = jnp.transpose(x_nchw, (0, 2, 3, 1)).astype(jnp.bfloat16)  # NCHW -> NHWC bf16
    x = conv_bn(x, params["conv1"], *params["bn1"], stride=2, pad=3, relu=True)
    x = maxpool_3x3_s2(x)
    for layer in params["layers"]:
        for block in layer:
            x = basic_block_forward(x, block)
    x = global_avgpool(x)                                        # (N, 512) f32
    return x                                                     # == x.view(N, -1)


# TODO(synk): pretrained torchvision weights are replaced by deterministic
# synthetic initialization (no checkpoint loading in this environment).

if __name__ == "__main__":
    key = jax.random.PRNGKey(0)
    k_in, k_par = jax.random.split(key)
    x = jax.random.normal(k_in, (2, 3, 32, 32), jnp.float32)     # NCHW like PyTorch
    params = init_resnet18(k_par)
    out = resnet_base_forward(x, params)
    out = jax.block_until_ready(out)
    assert out.shape == (2, 512) and out.dtype == jnp.float32
    print("KERNEL_OK")
</pallas_src>

<mosaic_0001>
module attributes {stable_mosaic.version = 11 : i64} {
  func.func @kernel(%arg0: i32, %arg1: i32, %arg2: memref<256x256xbf16, #tpu.memory_space<vmem>>, %arg3: memref<256x128xbf16, #tpu.memory_space<vmem>>, %arg4: memref<2x128xf32, #tpu.memory_space<vmem>>, %arg5: memref<256x128xbf16, #tpu.memory_space<vmem>>) attributes {dimension_semantics = [#tpu.dimension_semantics<parallel>, #tpu.dimension_semantics<parallel>], iteration_bounds = array<i64: 2, 1>, scalar_prefetch = 0 : i64, scratch_operands = 0 : i64, tpu.core_type = #tpu.core_type<tc>, window_params = [{transform_indices = @transform_0, window_bounds = array<i64: 256, 256>}, {transform_indices = @transform_1, window_bounds = array<i64: 256, 128>}, {transform_indices = @transform_2, window_bounds = array<i64: 2, 128>}, {transform_indices = @transform_3, window_bounds = array<i64: 256, 128>}]} {
    %c0 = arith.constant 0 : index
    %c0_0 = arith.constant 0 : index
    %0 = vector.load %arg2[%c0, %c0_0] : memref<256x256xbf16, #tpu.memory_space<vmem>>, vector<256x256xbf16>
    %c0_1 = arith.constant 0 : index
    %c0_2 = arith.constant 0 : index
    %1 = vector.load %arg3[%c0_1, %c0_2] : memref<256x128xbf16, #tpu.memory_space<vmem>>, vector<256x128xbf16>
    %cst = arith.constant dense<0.000000e+00> : vector<256x128xf32>
    %2 = tpu.matmul %0, %1, %cst {dimension_numbers = #tpu.dot_dimension_numbers<[1], [0], [0], [1], [0, 0, 1, 1], [], []>} : vector<256x256xbf16>, vector<256x128xbf16>, vector<256x128xf32> -> vector<256x128xf32>
    %c0_3 = arith.constant 0 : index
    %c0_4 = arith.constant 0 : index
    %3 = vector.load %arg4[%c0_3, %c0_4] : memref<2x128xf32, #tpu.memory_space<vmem>>, vector<2x128xf32>
    %4 = vector.extract_strided_slice %3 {offsets = [0, 0], sizes = [1, 128], strides = [1, 1]} : vector<2x128xf32> to vector<1x128xf32>
    %5 = vector.broadcast %4 : vector<1x128xf32> to vector<256x128xf32>
    %6 = arith.mulf %2, %5 : vector<256x128xf32>
    %7 = vector.extract_strided_slice %3 {offsets = [1, 0], sizes = [1, 128], strides = [1, 1]} : vector<2x128xf32> to vector<1x128xf32>
    %8 = vector.broadcast %7 : vector<1x128xf32> to vector<256x128xf32>
    %9 = arith.addf %6, %8 : vector<256x128xf32>
    %cst_5 = arith.constant 0.000000e+00 : f32
    %10 = vector.broadcast %cst_5 : f32 to vector<256x128xf32>
    %11 = arith.maximumf %9, %10 : vector<256x128xf32>
    %12 = arith.truncf %11 : vector<256x128xf32> to vector<256x128xbf16>
    %c0_6 = arith.constant 0 : index
    %c0_7 = arith.constant 0 : index
    %13 = vector.load %arg5[%c0_6, %c0_7] : memref<256x128xbf16, #tpu.memory_space<vmem>>, vector<256x128xbf16>
    tpu.vector_store %arg5[%c0_6, %c0_7], %12 {strides = array<i32>} : memref<256x128xbf16, #tpu.memory_space<vmem>>, vector<256x128xbf16>,
    return
  }
  func.func @transform_0(%arg0: i32, %arg1: i32) -> (i32, i32) {
    %c0_i32 = arith.constant 0 : i32
    %c0_i32_0 = arith.constant 0 : i32
    return %arg0, %c0_i32 : i32, i32
  }
  func.func @transform_1(%arg0: i32, %arg1: i32) -> (i32, i32) {
    %c0_i32 = arith.constant 0 : i32
    %c0_i32_0 = arith.constant 0 : i32
    return %c0_i32, %arg1 : i32, i32
  }
  func.func @transform_2(%arg0: i32, %arg1: i32) -> (i32, i32) {
    %c0_i32 = arith.constant 0 : i32
    %c0_i32_0 = arith.constant 0 : i32
    return %c0_i32, %arg1 : i32, i32
  }
  func.func @transform_3(%arg0: i32, %arg1: i32) -> (i32, i32) {
    %c0_i32 = arith.constant 0 : i32
    return %arg0, %arg1 : i32, i32
  }
}

</mosaic_0001>

<llo_original>
// kernel: tpu_custom_call.1
$region0: #{tpu_custom_call.1}
  #allocation0 [shape = 'u32[]', space=smem, size = 0x4, offset = 0x4, fixed_abs, tag = 'smem constant byte address 0x4 - core index']
  #allocation1 [shape = 'u32[72,128]{1,0:T(1,128)}', space=vmem, size = 0x9000, scoped, tag = 'internal scratch']
  %s0 = inlined_call_operand.hbm [shape: bf16[512,256], index: 0, kind: input, shape index: {}]
  %s1 = inlined_call_operand.hbm [shape: bf16[256,128], index: 1, kind: input, shape index: {}]
  %s2 = inlined_call_operand.hbm [shape: f32[2,128], index: 2, kind: input, shape index: {}]
  %s3 = inlined_call_operand.hbm [shape: bf16[512,128], index: 3, kind: output, shape index: {}]
  %s4 = sld [smem:[#allocation0]]
  $region57: #{tpu_custom_call.1} parent=0
    _
  %s6 = ssub.s32 1, %s4
  %s7 = scalar_select 0, %s6, %s4
  $region1: #{tpu_custom_call.1} parent=0
    #allocation2 [shape = 'u8[262144]{0}', space=vmem, size = 0x40000, scoped, tag = 'input window, operand 0']
    #allocation3 [shape = 's32[2]{0}', space=sflag, size = 0x8, scoped, tag = 'scoped memory for tpu_custom_call.1']
    #allocation4 [shape = 's32[2]{0}', space=sflag, size = 0x8, scoped, tag = 'scoped memory for tpu_custom_call.1']
    #allocation5 [shape = 'u8[65536]{0}', space=vmem, size = 0x10000, scoped, tag = 'input window, operand 1, single buffered']
    #allocation6 [shape = 's32[1]{0}', space=sflag, size = 0x4, scoped, tag = 'scoped memory for tpu_custom_call.1']
    #allocation7 [shape = 'u8[1024]{0}', space=vmem, size = 0x400, scoped, tag = 'input window, operand 2, single buffered']
    #allocation8 [shape = 'u8[131072]{0}', space=vmem, size = 0x20000, scoped, tag = 'output window, operand 0']
    %8 = vsyncpa [#allocation3], 0
    %s9 = scalar_lea.sflag [#allocation3], 1
    %10 = vsyncpa %s9, 0
    %11 = vsyncpa [#allocation6], 0
    %12 = vsyncpa [#allocation4], 0
    %s13 = scalar_lea.sflag [#allocation4], 1
    %14 = vsyncpa %s13, 0
    loop: start=0, step=1, limit=4
    $region2: #{tpu_custom_call.1} parent=1 // loop_pre_header
      _
    $region3: #{tpu_custom_call.1} parent=1 // loop_header
      %s16 = sphi 0, %s20
      %p17 = scmp.ge.s32.totalorder %s16, 4
      %s23 = sphi 0, %s35
      %s24 = sphi 0, %s31
      %s25 = sphi 0, %s23
      %s26 = sphi 0, %s24
      %s27 = sphi 0, %s25
      %s28 = sphi 0, %s26
      %s38 = sphi 0, %s40
      %s41 = sphi 0, %s38
      %s42 = sphi 0, %s41
      %s58 = sphi 0, %s42
      %s64 = sphi 0, %s66
      %s67 = sphi 0, %s64
      %s68 = sphi 0, %s67
      %s84 = sphi 0, %s68
      %s90 = sphi 0, %s92
      %s93 = sphi 0, %s90
      %s94 = sphi 0, %s93
      %s110 = sphi 0, %s94
      %s118 = sphi 0, %s120
      %s121 = sphi 0, %s118
      %s122 = sphi 0, %s121
      %s138 = sphi 0, %s122
    $region4: #{tpu_custom_call.1} parent=1 // loop_header_branch
      %19 = sbr.rel (%p17) target = $region8
    $region5: #{tpu_custom_call.1} parent=1 // loop_body
      %s21 = ssub.s32 %s16, 1
      %s22 = ssub.s32 %s16, 2
      %s29 = sadd.s32 1, %s24
      %p30 = scmp.ge.s32.totalorder %s29, 1
      %s31 = scalar_select %p30, 0, %s29
      %s32 = sadd.s32 1, %s23
      %s33 = scalar_select %p30, %s32, %s23
      %p34 = scmp.ge.s32.totalorder %s33, 2
      %s35 = scalar_select %p34, 0, %s33
      %s36 = ssub.s32 %s23, %s35
      %p37 = scmp.eq.s32.totalorder %s36, 0
      %s39 = sadd.s32 %s38, 1
      %s40 = scalar_select %p37, %s38, %s39
      %p43 = pneg %p37
      %p44 = scmp.eq.s32.totalorder %s16, 1
      %p45 = por %p43, %p44
      %p46 = scmp.ne.s32.totalorder %s38, %s41
      %p47 = scmp.eq.s32.totalorder %s16, 0
      %p48 = por %p46, %p47
      %p49 = scmp.ne.s32.totalorder %s38, %s41
      %p50 = scmp.eq.s32.totalorder %s21, 1
      %p51 = por %p49, %p50
      %p52 = scmp.ne.s32.totalorder %s41, %s42
      %p53 = scmp.eq.s32.totalorder %s21, 0
      %p54 = por %p52, %p53
      %p55 = scmp.ne.s32.totalorder %s41, %s42
      %p56 = scmp.eq.s32.totalorder %s22, 1
      %p57 = por %p55, %p56
      %p59 = scmp.ne.s32.totalorder %s42, %s58
      %p60 = scmp.eq.s32.totalorder %s22, 0
      %p61 = por %p59, %p60
      %s62 = ssub.s32 %s24, %s31
      %p63 = scmp.eq.s32.totalorder %s62, 0
      %s65 = sadd.s32 %s64, 1
      %s66 = scalar_select %p63, %s64, %s65
      %p69 = pneg %p63
      %p70 = scmp.eq.s32.totalorder %s16, 1
      %p71 = por %p69, %p70
      %p72 = scmp.ne.s32.totalorder %s64, %s67
      %p73 = scmp.eq.s32.totalorder %s16, 0
      %p74 = por %p72, %p73
      %p75 = scmp.ne.s32.totalorder %s64, %s67
      %p76 = scmp.eq.s32.totalorder %s21, 1
      %p77 = por %p75, %p76
      %p78 = scmp.ne.s32.totalorder %s67, %s68
      %p79 = scmp.eq.s32.totalorder %s21, 0
      %p80 = por %p78, %p79
      %p81 = scmp.ne.s32.totalorder %s67, %s68
      %p82 = scmp.eq.s32.totalorder %s22, 1
      %p83 = por %p81, %p82
      %p85 = scmp.ne.s32.totalorder %s68, %s84
      %p86 = scmp.eq.s32.totalorder %s22, 0
      %p87 = por %p85, %p86
      %s88 = ssub.s32 %s24, %s31
      %p89 = scmp.eq.s32.totalorder %s88, 0
      %s91 = sadd.s32 %s90, 1
      %s92 = scalar_select %p89, %s90, %s91
      %p95 = pneg %p89
      %p96 = scmp.eq.s32.totalorder %s16, 1
      %p97 = por %p95, %p96
      %p98 = scmp.ne.s32.totalorder %s90, %s93
      %p99 = scmp.eq.s32.totalorder %s16, 0
      %p100 = por %p98, %p99
      %p101 = scmp.ne.s32.totalorder %s90, %s93
      %p102 = scmp.eq.s32.totalorder %s21, 1
      %p103 = por %p101, %p102
      %p104 = scmp.ne.s32.totalorder %s93, %s94
      %p105 = scmp.eq.s32.totalorder %s21, 0
      %p106 = por %p104, %p105
      %p107 = scmp.ne.s32.totalorder %s93, %s94
      %p108 = scmp.eq.s32.totalorder %s22, 1
      %p109 = por %p107, %p108
      %p111 = scmp.ne.s32.totalorder %s94, %s110
      %p112 = scmp.eq.s32.totalorder %s22, 0
      %p113 = por %p111, %p112
      %s114 = ssub.s32 %s23, %s35
      %s115 = ssub.s32 %s24, %s31
      %s116 = sor.u32 %s114, %s115
      %p117 = scmp.eq.s32.totalorder %s116, 0
      %s119 = sadd.s32 %s118, 1
      %s120 = scalar_select %p117, %s118, %s119
      %p123 = pneg %p117
      %p124 = scmp.eq.s32.totalorder %s16, 1
      %p125 = por %p123, %p124
      %p126 = scmp.ne.s32.totalorder %s118, %s121
      %p127 = scmp.eq.s32.totalorder %s16, 0
      %p128 = por %p126, %p127
      %p129 = scmp.ne.s32.totalorder %s118, %s121
      %p130 = scmp.eq.s32.totalorder %s21, 1
      %p131 = por %p129, %p130
      %p132 = scmp.ne.s32.totalorder %s121, %s122
      %p133 = scmp.eq.s32.totalorder %s21, 0
      %p134 = por %p132, %p133
      %p135 = scmp.ne.s32.totalorder %s121, %s122
      %p136 = scmp.eq.s32.totalorder %s22, 1
      %p137 = por %p135, %p136
      %p139 = scmp.ne.s32.totalorder %s122, %s138
      %p140 = scmp.eq.s32.totalorder %s22, 0
      %p141 = por %p139, %p140
      %p142 = scmp.le.s32.totalorder 1, %s16
      %p143 = scmp.lt.s32.totalorder %s16, 3
      %p144 = pnand %p142, %p143
      %p145 = pneg %p144
      // Predicated region
      $region9: #{tpu_custom_call.1} parent=5 // pred_check
        _
      $region10: #{tpu_custom_call.1} parent=5 // pred_check_branch
        %147 = sbr.rel (%p144) target = $region12
      $region11: #{tpu_custom_call.1} parent=5 // pred_region
        %s148 = ssub.s32 %s16, 1
        // Predicated region
        $region13: #{tpu_custom_call.1} parent=11 // pred_check
          %p149 = pneg %p80
        $region14: #{tpu_custom_call.1} parent=11 // pred_check_branch
          %151 = sbr.rel (%p149) target = $region16
        $region15: #{tpu_custom_call.1} parent=11 // pred_region
          %153 = vsyncadd [#allocation6], 0
          %s154 = smul.addr %s26, 4
          %s155 = scalar_lea.hbm %s1, %s154
          %s156 = sshll.u32 %s155, 4
          %s157 = int_to_ptr.hbm [resolvable:$true] %s156
          %s158 = sshll.u32 [#allocation5], 4
          %s159 = int_to_ptr.vmem [resolvable:$true] %s158
          %164 = dma.hbm_to_vmem [thread:$0]  %s157, 2048, %s159, [#allocation6], 64, 64, 4
        $region16: #{tpu_custom_call.1} parent=11 // pred_fallthru
          _
        // Predicated region
        $region17: #{tpu_custom_call.1} parent=11 // pred_check
          %p165 = pneg %p106
        $region18: #{tpu_custom_call.1} parent=11 // pred_check_branch
          %167 = sbr.rel (%p165) target = $region20
        $region19: #{tpu_custom_call.1} parent=11 // pred_region
          %169 = vsyncadd [#allocation6], 0
          %s170 = smul.addr %s26, 2
          %s171 = scalar_lea.hbm %s2, %s170
          %s173 = sshll.u32 %s171, 4
          %s174 = int_to_ptr.hbm [resolvable:$true] %s173
          %s175 = sshll.u32 [#allocation7], 4
          %s176 = int_to_ptr.vmem [resolvable:$true] %s175
          %178 = dma.hbm_to_vmem [thread:$0]  %s174, 32, %s176, [#allocation6]
        $region20: #{tpu_custom_call.1} parent=11 // pred_fallthru
          _
      $region12: #{tpu_custom_call.1} parent=5 // pred_fallthru
        _
      %p179 = scmp.lt.s32.totalorder %s16, 2
      // Predicated region
      $region21: #{tpu_custom_call.1} parent=5 // pred_check
        %p180 = pneg %p179
      $region22: #{tpu_custom_call.1} parent=5 // pred_check_branch
        %182 = sbr.rel (%p180) target = $region24
      $region23: #{tpu_custom_call.1} parent=5 // pred_region
        // Predicated region
        $region25: #{tpu_custom_call.1} parent=23 // pred_check
          %p183 = pneg %p48
        $region26: #{tpu_custom_call.1} parent=23 // pred_check_branch
          %185 = sbr.rel (%p183) target = $region28
        $region27: #{tpu_custom_call.1} parent=23 // pred_region
          %s186 = sand.u32 %s38, 1
          %s187 = scalar_lea.sflag [#allocation3], %s186
          %s188 = sand.u32 %s38, 1
          %s189 = smul.addr %s188, 256
          %s190 = scalar_lea.vmem [#allocation2], %s189
          %s191 = smul.u32 32, %s23
          %193 = vsyncadd %s187, 0
          %s194 = smul.addr %s191, 2
          %s195 = smul.addr %s194, 4
          %s196 = scalar_lea.hbm %s0, %s195
          %s197 = sshll.u32 %s196, 4
          %s198 = int_to_ptr.hbm [resolvable:$true] %s197
          %s199 = sshll.u32 %s190, 4
          %s200 = int_to_ptr.vmem [resolvable:$true] %s199
          %205 = dma.hbm_to_vmem [thread:$0]  %s198, 4096, %s200, %s187, 128, 128, 8
        $region28: #{tpu_custom_call.1} parent=23 // pred_fallthru
          _
      $region24: #{tpu_custom_call.1} parent=5 // pred_fallthru
        _
      %p206 = scmp.le.s32.totalorder 1, %s16
      %p207 = scmp.lt.s32.totalorder %s16, 3
      %p208 = pnand %p206, %p207
      %p209 = pneg %p208
      // Predicated region
      $region29: #{tpu_custom_call.1} parent=5 // pred_check
        _
      $region30: #{tpu_custom_call.1} parent=5 // pred_check_branch
        %211 = sbr.rel (%p208) target = $region32
      $region31: #{tpu_custom_call.1} parent=5 // pred_region
        %s212 = ssub.s32 %s16, 1
        %s213 = sand.u32 %s41, 1
        %s214 = scalar_lea.sflag [#allocation3], %s213
        %s215 = sand.u32 %s41, 1
        %s216 = smul.addr %s215, 256
        %s217 = scalar_lea.vmem [#allocation2], %s216
        // Predicated region
        $region33: #{tpu_custom_call.1} parent=31 // pred_check
          %p218 = pneg %p54
        $region34: #{tpu_custom_call.1} parent=31 // pred_check_branch
          %220 = sbr.rel (%p218) target = $region36
        $region35: #{tpu_custom_call.1} parent=31 // pred_region
          %222 = dma.done %s214, 4096
        $region36: #{tpu_custom_call.1} parent=31 // pred_fallthru
          _
        // Predicated region
        $region37: #{tpu_custom_call.1} parent=31 // pred_check
          %p223 = pneg %p80
        $region38: #{tpu_custom_call.1} parent=31 // pred_check_branch
          %225 = sbr.rel (%p223) target = $region40
        $region39: #{tpu_custom_call.1} parent=31 // pred_region
          %227 = dma.done [#allocation6], 2048
        $region40: #{tpu_custom_call.1} parent=31 // pred_fallthru
          _
        // Predicated region
        $region41: #{tpu_custom_call.1} parent=31 // pred_check
          %p228 = pneg %p106
        $region42: #{tpu_custom_call.1} parent=31 // pred_check_branch
          %230 = sbr.rel (%p228) target = $region44
        $region43: #{tpu_custom_call.1} parent=31 // pred_region
          %232 = dma.done [#allocation6], 32
        $region44: #{tpu_custom_call.1} parent=31 // pred_fallthru
          _
        %s233 = sand.u32 %s41, 1
        %s234 = scalar_lea.sflag [#allocation3], %s233
        %s235 = sand.u32 %s41, 1
        %s236 = smul.addr %s235, 256
        %s237 = scalar_lea.vmem [#allocation2], %s236
        %p238 = pneg %p54
        %p239 = pneg %p51
        %p240 = pneg %p80
        %p241 = pneg %p77
        %p242 = pneg %p106
        %p243 = pneg %p103
        %p244 = pneg %p134
        %p245 = pneg %p131
        %s246 = sand.u32 %s121, 1
        %s247 = scalar_lea.sflag [#allocation4], %s246
        %s248 = sand.u32 %s121, 1
        %s249 = smul.addr %s248, 128
        %s250 = scalar_lea.vmem [#allocation8], %s249
        %s251 = smul.u32 32, %s25
        %s252 = smul.u32 32, %s25
        %v253 = vld [vmem:[%s217] sm:$0xff]
        %v254 = vld [vmem:[%s217 + $0x8] sm:$0xff]
        %v255 = vld [vmem:[%s217 + $0x10] sm:$0xff]
        %v256 = vld [vmem:[%s217 + $0x18] sm:$0xff]
        %v257 = vld [vmem:[%s217 + $0x20] sm:$0xff]
        %v258 = vld [vmem:[%s217 + $0x28] sm:$0xff]
        %v259 = vld [vmem:[%s217 + $0x30] sm:$0xff]
        %v260 = vld [vmem:[%s217 + $0x38] sm:$0xff]
        %v261 = vld [vmem:[%s217 + $0x40] sm:$0xff]
        %v262 = vld [vmem:[%s217 + $0x48] sm:$0xff]
        %v263 = vld [vmem:[%s217 + $0x50] sm:$0xff]
        %v264 = vld [vmem:[%s217 + $0x58] sm:$0xff]
        %v265 = vld [vmem:[%s217 + $0x60] sm:$0xff]
        %v266 = vld [vmem:[%s217 + $0x68] sm:$0xff]
        %v267 = vld [vmem:[%s217 + $0x70] sm:$0xff]
        %v268 = vld [vmem:[%s217 + $0x78] sm:$0xff]
        %v269 = vld [vmem:[%s217 + $0x80] sm:$0xff]
        %v270 = vld [vmem:[%s217 + $0x88] sm:$0xff]
        %v271 = vld [vmem:[%s217 + $0x90] sm:$0xff]
        %v272 = vld [vmem:[%s217 + $0x98] sm:$0xff]
        %v273 = vld [vmem:[%s217 + $0xa0] sm:$0xff]
        %v274 = vld [vmem:[%s217 + $0xa8] sm:$0xff]
        %v275 = vld [vmem:[%s217 + $0xb0] sm:$0xff]
        %v276 = vld [vmem:[%s217 + $0xb8] sm:$0xff]
        %v277 = vld [vmem:[%s217 + $0xc0] sm:$0xff]
        %v278 = vld [vmem:[%s217 + $0xc8] sm:$0xff]
        %v279 = vld [vmem:[%s217 + $0xd0] sm:$0xff]
        %v280 = vld [vmem:[%s217 + $0xd8] sm:$0xff]
        %v281 = vld [vmem:[%s217 + $0xe0] sm:$0xff]
        %v282 = vld [vmem:[%s217 + $0xe8] sm:$0xff]
        %v283 = vld [vmem:[%s217 + $0xf0] sm:$0xff]
        %v284 = vld [vmem:[%s217 + $0xf8] sm:$0xff]
        %v285 = vld [vmem:[#allocation5] sm:$0xf]
        %v286 = vld [vmem:[#allocation5 + $0x4] sm:$0xf]
        %v287 = vld [vmem:[#allocation5 + $0x8] sm:$0xf]
        %v288 = vld [vmem:[#allocation5 + $0xc] sm:$0xf]
        %v289 = vld [vmem:[#allocation5 + $0x10] sm:$0xf]
        %v290 = vld [vmem:[#allocation5 + $0x14] sm:$0xf]
        %v291 = vld [vmem:[#allocation5 + $0x18] sm:$0xf]
        %v292 = vld [vmem:[#allocation5 + $0x1c] sm:$0xf]
        %v293 = vld [vmem:[#allocation5 + $0x20] sm:$0xf]
        %v294 = vld [vmem:[#allocation5 + $0x24] sm:$0xf]
        %v295 = vld [vmem:[#allocation5 + $0x28] sm:$0xf]
        %v296 = vld [vmem:[#allocation5 + $0x2c] sm:$0xf]
        %v297 = vld [vmem:[#allocation5 + $0x30] sm:$0xf]
        %v298 = vld [vmem:[#allocation5 + $0x34] sm:$0xf]
        %v299 = vld [vmem:[#allocation5 + $0x38] sm:$0xf]
        %v300 = vld [vmem:[#allocation5 + $0x3c] sm:$0xf]
        %v301 = vld [vmem:[#allocation5 + $0x40] sm:$0xf]
        %v302 = vld [vmem:[#allocation5 + $0x44] sm:$0xf]
        %v303 = vld [vmem:[#allocation5 + $0x48] sm:$0xf]
        %v304 = vld [vmem:[#allocation5 + $0x4c] sm:$0xf]
        %v305 = vld [vmem:[#allocation5 + $0x50] sm:$0xf]
        %v306 = vld [vmem:[#allocation5 + $0x54] sm:$0xf]
        %v307 = vld [vmem:[#allocation5 + $0x58] sm:$0xf]
        %v308 = vld [vmem:[#allocation5 + $0x5c] sm:$0xf]
        %v309 = vld [vmem:[#allocation5 + $0x60] sm:$0xf]
        %v310 = vld [vmem:[#allocation5 + $0x64] sm:$0xf]
        %v311 = vld [vmem:[#allocation5 + $0x68] sm:$0xf]
        %v312 = vld [vmem:[#allocation5 + $0x6c] sm:$0xf]
        %v313 = vld [vmem:[#allocation5 + $0x70] sm:$0xf]
        %v314 = vld [vmem:[#allocation5 + $0x74] sm:$0xf]
        %v315 = vld [vmem:[#allocation5 + $0x78] sm:$0xf]
        %v316 = vld [vmem:[#allocation5 + $0x7c] sm:$0xf]
        %v349 = vunpack.c.l.b16 %v253
        %v350 = vunpack.c.h.b16 %v253
        %v351 = vunpack.c.l.b16 %v254
        %v352 = vunpack.c.h.b16 %v254
        %v353 = vunpack.c.l.b16 %v255
        %v354 = vunpack.c.h.b16 %v255
        %v355 = vunpack.c.l.b16 %v256
        %v356 = vunpack.c.h.b16 %v256
        %v357 = vunpack.c.l.b16 %v257
        %v358 = vunpack.c.h.b16 %v257
        %v359 = vunpack.c.l.b16 %v258
        %v360 = vunpack.c.h.b16 %v258
        %v361 = vunpack.c.l.b16 %v259
        %v362 = vunpack.c.h.b16 %v259
        %v363 = vunpack.c.l.b16 %v260
        %v364 = vunpack.c.h.b16 %v260
        %v365 = vunpack.c.l.b16 %v261
        %v366 = vunpack.c.h.b16 %v261
        %v367 = vunpack.c.l.b16 %v262
        %v368 = vunpack.c.h.b16 %v262
        %v369 = vunpack.c.l.b16 %v263
        %v370 = vunpack.c.h.b16 %v263
        %v371 = vunpack.c.l.b16 %v264
        %v372 = vunpack.c.h.b16 %v264
        %v373 = vunpack.c.l.b16 %v265
        %v374 = vunpack.c.h.b16 %v265
        %v375 = vunpack.c.l.b16 %v266
        %v376 = vunpack.c.h.b16 %v266
        %v377 = vunpack.c.l.b16 %v267
        %v378 = vunpack.c.h.b16 %v267
        %v379 = vunpack.c.l.b16 %v268
        %v380 = vunpack.c.h.b16 %v268
        %v381 = vunpack.c.l.b16 %v269
        %v382 = vunpack.c.h.b16 %v269
        %v383 = vunpack.c.l.b16 %v270
        %v384 = vunpack.c.h.b16 %v270
        %v385 = vunpack.c.l.b16 %v271
        %v386 = vunpack.c.h.b16 %v271
        %v387 = vunpack.c.l.b16 %v272
        %v388 = vunpack.c.h.b16 %v272
        %v389 = vunpack.c.l.b16 %v273
        %v390 = vunpack.c.h.b16 %v273
        %v391 = vunpack.c.l.b16 %v274
        %v392 = vunpack.c.h.b16 %v274
        %v393 = vunpack.c.l.b16 %v275
        %v394 = vunpack.c.h.b16 %v275
        %v395 = vunpack.c.l.b16 %v276
        %v396 = vunpack.c.h.b16 %v276
        %v397 = vunpack.c.l.b16 %v277
        %v398 = vunpack.c.h.b16 %v277
        %v399 = vunpack.c.l.b16 %v278
        %v400 = vunpack.c.h.b16 %v278
        %v401 = vunpack.c.l.b16 %v279
        %v402 = vunpack.c.h.b16 %v279
        %v403 = vunpack.c.l.b16 %v280
        %v404 = vunpack.c.h.b16 %v280
        %v405 = vunpack.c.l.b16 %v281
        %v406 = vunpack.c.h.b16 %v281
        %v407 = vunpack.c.l.b16 %v282
        %v408 = vunpack.c.h.b16 %v282
        %v409 = vunpack.c.l.b16 %v283
        %v410 = vunpack.c.h.b16 %v283
        %v411 = vunpack.c.l.b16 %v284
        %v412 = vunpack.c.h.b16 %v284
        %v413 = vpack.c.b16 %v351, %v349
        %v414 = vpack.c.b16 %v352, %v350
        %v415 = vpack.c.b16 %v355, %v353
        %v416 = vpack.c.b16 %v356, %v354
        %v417 = vpack.c.b16 %v359, %v357
        %v418 = vpack.c.b16 %v360, %v358
        %v419 = vpack.c.b16 %v363, %v361
        %v420 = vpack.c.b16 %v364, %v362
        %v421 = vpack.c.b16 %v367, %v365
        %v422 = vpack.c.b16 %v368, %v366
        %v423 = vpack.c.b16 %v371, %v369
        %v424 = vpack.c.b16 %v372, %v370
        %v425 = vpack.c.b16 %v375, %v373
        %v426 = vpack.c.b16 %v376, %v374
        %v427 = vpack.c.b16 %v379, %v377
        %v428 = vpack.c.b16 %v380, %v378
        %v429 = vpack.c.b16 %v383, %v381
        %v430 = vpack.c.b16 %v384, %v382
        %v431 = vpack.c.b16 %v387, %v385
        %v432 = vpack.c.b16 %v388, %v386
        %v433 = vpack.c.b16 %v391, %v389
        %v434 = vpack.c.b16 %v392, %v390
        %v435 = vpack.c.b16 %v395, %v393
        %v436 = vpack.c.b16 %v396, %v394
        %v437 = vpack.c.b16 %v399, %v397
        %v438 = vpack.c.b16 %v400, %v398
        %v439 = vpack.c.b16 %v403, %v401
        %v440 = vpack.c.b16 %v404, %v402
        %v441 = vpack.c.b16 %v407, %v405
        %v442 = vpack.c.b16 %v408, %v406
        %v443 = vpack.c.b16 %v411, %v409
        %v444 = vpack.c.b16 %v412, %v410
        %v509 = vunpack.c.l.b16 %v285
        %v510 = vunpack.c.l.b16 %v286
        %v511 = vunpack.c.l.b16 %v287
        %v512 = vunpack.c.l.b16 %v288
        %v513 = vunpack.c.l.b16 %v289
        %v514 = vunpack.c.l.b16 %v290
        %v515 = vunpack.c.l.b16 %v291
        %v516 = vunpack.c.l.b16 %v292
        %v517 = vunpack.c.l.b16 %v293
        %v518 = vunpack.c.l.b16 %v294
        %v519 = vunpack.c.l.b16 %v295
        %v520 = vunpack.c.l.b16 %v296
        %v521 = vunpack.c.l.b16 %v297
        %v522 = vunpack.c.l.b16 %v298
        %v523 = vunpack.c.l.b16 %v299
        %v524 = vunpack.c.l.b16 %v300
        %v525 = vunpack.c.l.b16 %v301
        %v526 = vunpack.c.l.b16 %v302
        %v527 = vunpack.c.l.b16 %v303
        %v528 = vunpack.c.l.b16 %v304
        %v529 = vunpack.c.l.b16 %v305
        %v530 = vunpack.c.l.b16 %v306
        %v531 = vunpack.c.l.b16 %v307
        %v532 = vunpack.c.l.b16 %v308
        %v533 = vunpack.c.l.b16 %v309
        %v534 = vunpack.c.l.b16 %v310
        %v535 = vunpack.c.l.b16 %v311
        %v536 = vunpack.c.l.b16 %v312
        %v537 = vunpack.c.l.b16 %v313
        %v538 = vunpack.c.l.b16 %v314
        %v539 = vunpack.c.l.b16 %v315
        %v540 = vunpack.c.l.b16 %v316
        %v541 = vpack.c.b16 %v510, %v509
        %v542 = vpack.c.b16 %v512, %v511
        %v543 = vpack.c.b16 %v514, %v513
        %v544 = vpack.c.b16 %v516, %v515
        %v545 = vpack.c.b16 %v518, %v517
        %v546 = vpack.c.b16 %v520, %v519
        %v547 = vpack.c.b16 %v522, %v521
        %v548 = vpack.c.b16 %v524, %v523
        %v549 = vpack.c.b16 %v526, %v525
        %v550 = vpack.c.b16 %v528, %v527
        %v551 = vpack.c.b16 %v530, %v529
        %v552 = vpack.c.b16 %v532, %v531
        %v553 = vpack.c.b16 %v534, %v533
        %v554 = vpack.c.b16 %v536, %v535
        %v555 = vpack.c.b16 %v538, %v537
        %v556 = vpack.c.b16 %v540, %v539
        %573 = vmatpush.bf16.msra.mxu0 %v548
        %574 = vmatpush.bf16.msra.mxu0 %v547
        %575 = vmatpush.bf16.msra.mxu0 %v546
        %576 = vmatpush.bf16.msra.mxu0 %v545
        %577 = vmatpush.bf16.msra.mxu0 %v544
        %578 = vmatpush.bf16.msra.mxu0 %v543
        %579 = vmatpush.bf16.msra.mxu0 %v542
        %580 = vmatpush.bf16.msra.mxu0 %v541
        %581 = vmatmul.bf16.gmra.mxu0 %v413
        %v582 = vpop.f32.mrf.mxu0
        %v583 = vadd.f32 0.0, %v582
        %v584 = vpop.f32.mrf.mxu0
        %v585 = vadd.f32 0.0, %v584
        %586 = vmatmul.bf16.gmra.mxu0 %v415
        %v587 = vpop.f32.mrf.mxu0
        %v588 = vadd.f32 0.0, %v587
        %v589 = vpop.f32.mrf.mxu0
        %v590 = vadd.f32 0.0, %v589
        %591 = vmatmul.bf16.gmra.mxu0 %v417
        %v592 = vpop.f32.mrf.mxu0
        %v593 = vadd.f32 0.0, %v592
        %v594 = vpop.f32.mrf.mxu0
        %v595 = vadd.f32 0.0, %v594
        %596 = vmatmul.bf16.gmra.mxu0 %v419
        %v597 = vpop.f32.mrf.mxu0
        %v598 = vadd.f32 0.0, %v597
        %v599 = vpop.f32.mrf.mxu0
        %v600 = vadd.f32 0.0, %v599
        %601 = vmatmul.bf16.gmra.mxu0 %v421
        %v602 = vpop.f32.mrf.mxu0
        %v603 = vadd.f32 0.0, %v602
        %v604 = vpop.f32.mrf.mxu0
        %v605 = vadd.f32 0.0, %v604
        %606 = vmatmul.bf16.gmra.mxu0 %v423
        %v607 = vpop.f32.mrf.mxu0
        %v608 = vadd.f32 0.0, %v607
        %v609 = vpop.f32.mrf.mxu0
        %v610 = vadd.f32 0.0, %v609
        %611 = vmatmul.bf16.gmra.mxu0 %v425
        %v612 = vpop.f32.mrf.mxu0
        %v613 = vadd.f32 0.0, %v612
        %v614 = vpop.f32.mrf.mxu0
        %v615 = vadd.f32 0.0, %v614
        %616 = vmatmul.bf16.gmra.mxu0 %v427
        %v617 = vpop.f32.mrf.mxu0
        %v618 = vadd.f32 0.0, %v617
        %v619 = vpop.f32.mrf.mxu0
        %v620 = vadd.f32 0.0, %v619
        %621 = vmatmul.bf16.gmra.mxu0 %v429
        %v622 = vpop.f32.mrf.mxu0
        %v623 = vadd.f32 0.0, %v622
        %v624 = vpop.f32.mrf.mxu0
        %v625 = vadd.f32 0.0, %v624
        %626 = vmatmul.bf16.gmra.mxu0 %v431
        %v627 = vpop.f32.mrf.mxu0
        %v628 = vadd.f32 0.0, %v627
        %v629 = vpop.f32.mrf.mxu0
        %v630 = vadd.f32 0.0, %v629
        %631 = vmatmul.bf16.gmra.mxu0 %v433
        %v632 = vpop.f32.mrf.mxu0
        %v633 = vadd.f32 0.0, %v632
        %v634 = vpop.f32.mrf.mxu0
        %v635 = vadd.f32 0.0, %v634
        %636 = vmatmul.bf16.gmra.mxu0 %v435
        %v637 = vpop.f32.mrf.mxu0
        %v638 = vadd.f32 0.0, %v637
        %v639 = vpop.f32.mrf.mxu0
        %v640 = vadd.f32 0.0, %v639
        %641 = vmatmul.bf16.gmra.mxu0 %v437
        %v642 = vpop.f32.mrf.mxu0
        %v643 = vadd.f32 0.0, %v642
        %v644 = vpop.f32.mrf.mxu0
        %v645 = vadd.f32 0.0, %v644
        %646 = vmatmul.bf16.gmra.mxu0 %v439
        %v647 = vpop.f32.mrf.mxu0
        %v648 = vadd.f32 0.0, %v647
        %v649 = vpop.f32.mrf.mxu0
        %v650 = vadd.f32 0.0, %v649
        %651 = vmatmul.bf16.gmra.mxu0 %v441
        %v652 = vpop.f32.mrf.mxu0
        %v653 = vadd.f32 0.0, %v652
        %v654 = vpop.f32.mrf.mxu0
        %v655 = vadd.f32 0.0, %v654
        %656 = vmatmul.bf16.gmra.mxu0 %v443
        %v657 = vpop.f32.mrf.mxu0
        %v658 = vadd.f32 0.0, %v657
        %v659 = vpop.f32.mrf.mxu0
        %v660 = vadd.f32 0.0, %v659
        %661 = vdwg.mxu0
        %662 = vmatpush.bf16.msra.mxu0 %v556
        %663 = vmatpush.bf16.msra.mxu0 %v555
        %664 = vmatpush.bf16.msra.mxu0 %v554
        %665 = vmatpush.bf16.msra.mxu0 %v553
        %666 = vmatpush.bf16.msra.mxu0 %v552
        %667 = vmatpush.bf16.msra.mxu0 %v551
        %668 = vmatpush.bf16.msra.mxu0 %v550
        %669 = vmatpush.bf16.msra.mxu0 %v549
        %670 = vmatmul.bf16.gmra.mxu0 %v414
        %v671 = vpop.f32.mrf.mxu0
        %v672 = vadd.f32 %v583, %v671
        %v673 = vpop.f32.mrf.mxu0
        %v674 = vadd.f32 %v585, %v673
        %675 = vmatmul.bf16.gmra.mxu0 %v416
        %v676 = vpop.f32.mrf.mxu0
        %v677 = vadd.f32 %v588, %v676
        %v678 = vpop.f32.mrf.mxu0
        %v679 = vadd.f32 %v590, %v678
        %680 = vmatmul.bf16.gmra.mxu0 %v418
        %v681 = vpop.f32.mrf.mxu0
        %v682 = vadd.f32 %v593, %v681
        %v683 = vpop.f32.mrf.mxu0
        %v684 = vadd.f32 %v595, %v683
        %685 = vmatmul.bf16.gmra.mxu0 %v420
        %v686 = vpop.f32.mrf.mxu0
        %v687 = vadd.f32 %v598, %v686
        %v688 = vpop.f32.mrf.mxu0
        %v689 = vadd.f32 %v600, %v688
        %690 = vmatmul.bf16.gmra.mxu0 %v422
        %v691 = vpop.f32.mrf.mxu0
        %v692 = vadd.f32 %v603, %v691
        %v693 = vpop.f32.mrf.mxu0
        %v694 = vadd.f32 %v605, %v693
        %695 = vmatmul.bf16.gmra.mxu0 %v424
        %v696 = vpop.f32.mrf.mxu0
        %v697 = vadd.f32 %v608, %v696
        %v698 = vpop.f32.mrf.mxu0
        %v699 = vadd.f32 %v610, %v698
        %700 = vmatmul.bf16.gmra.mxu0 %v426
        %v701 = vpop.f32.mrf.mxu0
        %v702 = vadd.f32 %v613, %v701
        %v703 = vpop.f32.mrf.mxu0
        %v704 = vadd.f32 %v615, %v703
        %705 = vmatmul.bf16.gmra.mxu0 %v428
        %v706 = vpop.f32.mrf.mxu0
        %v707 = vadd.f32 %v618, %v706
        %v708 = vpop.f32.mrf.mxu0
        %v709 = vadd.f32 %v620, %v708
        %710 = vmatmul.bf16.gmra.mxu0 %v430
        %v711 = vpop.f32.mrf.mxu0
        %v712 = vadd.f32 %v623, %v711
        %v713 = vpop.f32.mrf.mxu0
        %v714 = vadd.f32 %v625, %v713
        %715 = vmatmul.bf16.gmra.mxu0 %v432
        %v716 = vpop.f32.mrf.mxu0
        %v717 = vadd.f32 %v628, %v716
        %v718 = vpop.f32.mrf.mxu0
        %v719 = vadd.f32 %v630, %v718
        %720 = vmatmul.bf16.gmra.mxu0 %v434
        %v721 = vpop.f32.mrf.mxu0
        %v722 = vadd.f32 %v633, %v721
        %v723 = vpop.f32.mrf.mxu0
        %v724 = vadd.f32 %v635, %v723
        %725 = vmatmul.bf16.gmra.mxu0 %v436
        %v726 = vpop.f32.mrf.mxu0
        %v727 = vadd.f32 %v638, %v726
        %v728 = vpop.f32.mrf.mxu0
        %v729 = vadd.f32 %v640, %v728
        %730 = vmatmul.bf16.gmra.mxu0 %v438
        %v731 = vpop.f32.mrf.mxu0
        %v732 = vadd.f32 %v643, %v731
        %v733 = vpop.f32.mrf.mxu0
        %v734 = vadd.f32 %v645, %v733
        %735 = vmatmul.bf16.gmra.mxu0 %v440
        %v736 = vpop.f32.mrf.mxu0
        %v737 = vadd.f32 %v648, %v736
        %v738 = vpop.f32.mrf.mxu0
        %v739 = vadd.f32 %v650, %v738
        %740 = vmatmul.bf16.gmra.mxu0 %v442
        %v741 = vpop.f32.mrf.mxu0
        %v742 = vadd.f32 %v653, %v741
        %v743 = vpop.f32.mrf.mxu0
        %v744 = vadd.f32 %v655, %v743
        %745 = vmatmul.bf16.gmra.mxu0 %v444
        %v746 = vpop.f32.mrf.mxu0
        %v747 = vadd.f32 %v658, %v746
        %v748 = vpop.f32.mrf.mxu0
        %v749 = vadd.f32 %v660, %v748
        %750 = vdwg.mxu0
        %v751 = vld [vmem:[#allocation7] sm:$0x3]
        %v752 = vperm.slane %v751, 0
        %v753 = vmul.f32 %v672, %v752
        %v754 = vmul.f32 %v674, %v752
        %v755 = vmul.f32 %v677, %v752
        %v756 = vmul.f32 %v679, %v752
        %v757 = vmul.f32 %v682, %v752
        %v758 = vmul.f32 %v684, %v752
        %v759 = vmul.f32 %v687, %v752
        %v760 = vmul.f32 %v689, %v752
        %v761 = vmul.f32 %v692, %v752
        %v762 = vmul.f32 %v694, %v752
        %v763 = vmul.f32 %v697, %v752
        %v764 = vmul.f32 %v699, %v752
        %v765 = vmul.f32 %v702, %v752
        %v766 = vmul.f32 %v704, %v752
        %v767 = vmul.f32 %v707, %v752
        %v768 = vmul.f32 %v709, %v752
        %v769 = vmul.f32 %v712, %v752
        %v770 = vmul.f32 %v714, %v752
        %v771 = vmul.f32 %v717, %v752
        %v772 = vmul.f32 %v719, %v752
        %v773 = vmul.f32 %v722, %v752
        %v774 = vmul.f32 %v724, %v752
        %v775 = vmul.f32 %v727, %v752
        %v776 = vmul.f32 %v729, %v752
        %v777 = vmul.f32 %v732, %v752
        %v778 = vmul.f32 %v734, %v752
        %v779 = vmul.f32 %v737, %v752
        %v780 = vmul.f32 %v739, %v752
        %v781 = vmul.f32 %v742, %v752
        %v782 = vmul.f32 %v744, %v752
        %v783 = vmul.f32 %v747, %v752
        %v784 = vmul.f32 %v749, %v752
        %v785 = vperm.slane %v751, 1
        %v786 = vadd.f32 %v753, %v785
        %v787 = vadd.f32 %v754, %v785
        %v788 = vadd.f32 %v755, %v785
        %v789 = vadd.f32 %v756, %v785
        %v790 = vadd.f32 %v757, %v785
        %v791 = vadd.f32 %v758, %v785
        %v792 = vadd.f32 %v759, %v785
        %v793 = vadd.f32 %v760, %v785
        %v794 = vadd.f32 %v761, %v785
        %v795 = vadd.f32 %v762, %v785
        %v796 = vadd.f32 %v763, %v785
        %v797 = vadd.f32 %v764, %v785
        %v798 = vadd.f32 %v765, %v785
        %v799 = vadd.f32 %v766, %v785
        %v800 = vadd.f32 %v767, %v785
        %v801 = vadd.f32 %v768, %v785
        %v802 = vadd.f32 %v769, %v785
        %v803 = vadd.f32 %v770, %v785
        %v804 = vadd.f32 %v771, %v785
        %v805 = vadd.f32 %v772, %v785
        %v806 = vadd.f32 %v773, %v785
        %v807 = vadd.f32 %v774, %v785
        %v808 = vadd.f32 %v775, %v785
        %v809 = vadd.f32 %v776, %v785
        %v810 = vadd.f32 %v777, %v785
        %v811 = vadd.f32 %v778, %v785
        %v812 = vadd.f32 %v779, %v785
        %v813 = vadd.f32 %v780, %v785
        %v814 = vadd.f32 %v781, %v785
        %v815 = vadd.f32 %v782, %v785
        %v816 = vadd.f32 %v783, %v785
        %v817 = vadd.f32 %v784, %v785
        %v818 = vmax.f32 %v786, 0.0
        %v819 = vmax.f32 %v787, 0.0
        %v820 = vmax.f32 %v788, 0.0
        %v821 = vmax.f32 %v789, 0.0
        %v822 = vmax.f32 %v790, 0.0
        %v823 = vmax.f32 %v791, 0.0
        %v824 = vmax.f32 %v792, 0.0
        %v825 = vmax.f32 %v793, 0.0
        %v826 = vmax.f32 %v794, 0.0
        %v827 = vmax.f32 %v795, 0.0
        %v828 = vmax.f32 %v796, 0.0
        %v829 = vmax.f32 %v797, 0.0
        %v830 = vmax.f32 %v798, 0.0
        %v831 = vmax.f32 %v799, 0.0
        %v832 = vmax.f32 %v800, 0.0
        %v833 = vmax.f32 %v801, 0.0
        %v834 = vmax.f32 %v802, 0.0
        %v835 = vmax.f32 %v803, 0.0
        %v836 = vmax.f32 %v804, 0.0
        %v837 = vmax.f32 %v805, 0.0
        %v838 = vmax.f32 %v806, 0.0
        %v839 = vmax.f32 %v807, 0.0
        %v840 = vmax.f32 %v808, 0.0
        %v841 = vmax.f32 %v809, 0.0
        %v842 = vmax.f32 %v810, 0.0
        %v843 = vmax.f32 %v811, 0.0
        %v844 = vmax.f32 %v812, 0.0
        %v845 = vmax.f32 %v813, 0.0
        %v846 = vmax.f32 %v814, 0.0
        %v847 = vmax.f32 %v815, 0.0
        %v848 = vmax.f32 %v816, 0.0
        %v849 = vmax.f32 %v817, 0.0
        %v850 = vpack.c.bf16 %v818, %v818
        %v851 = vpack.c.bf16 %v819, %v819
        %v852 = vpack.c.bf16 %v820, %v820
        %v853 = vpack.c.bf16 %v821, %v821
        %v854 = vpack.c.bf16 %v822, %v822
        %v855 = vpack.c.bf16 %v823, %v823
        %v856 = vpack.c.bf16 %v824, %v824
        %v857 = vpack.c.bf16 %v825, %v825
        %v858 = vpack.c.bf16 %v826, %v826
        %v859 = vpack.c.bf16 %v827, %v827
        %v860 = vpack.c.bf16 %v828, %v828
        %v861 = vpack.c.bf16 %v829, %v829
        %v862 = vpack.c.bf16 %v830, %v830
        %v863 = vpack.c.bf16 %v831, %v831
        %v864 = vpack.c.bf16 %v832, %v832
        %v865 = vpack.c.bf16 %v833, %v833
        %v866 = vpack.c.bf16 %v834, %v834
        %v867 = vpack.c.bf16 %v835, %v835
        %v868 = vpack.c.bf16 %v836, %v836
        %v869 = vpack.c.bf16 %v837, %v837
        %v870 = vpack.c.bf16 %v838, %v838
        %v871 = vpack.c.bf16 %v839, %v839
        %v872 = vpack.c.bf16 %v840, %v840
        %v873 = vpack.c.bf16 %v841, %v841
        %v874 = vpack.c.bf16 %v842, %v842
        %v875 = vpack.c.bf16 %v843, %v843
        %v876 = vpack.c.bf16 %v844, %v844
        %v877 = vpack.c.bf16 %v845, %v845
        %v878 = vpack.c.bf16 %v846, %v846
        %v879 = vpack.c.bf16 %v847, %v847
        %v880 = vpack.c.bf16 %v848, %v848
        %v881 = vpack.c.bf16 %v849, %v849
        %882 = vst [vmem:[%s250] sm:$0xf] %v850
        %883 = vst [vmem:[%s250 + $0x4] sm:$0xf] %v851
        %884 = vst [vmem:[%s250 + $0x8] sm:$0xf] %v852
        %885 = vst [vmem:[%s250 + $0xc] sm:$0xf] %v853
        %886 = vst [vmem:[%s250 + $0x10] sm:$0xf] %v854
        %887 = vst [vmem:[%s250 + $0x14] sm:$0xf] %v855
        %888 = vst [vmem:[%s250 + $0x18] sm:$0xf] %v856
        %889 = vst [vmem:[%s250 + $0x1c] sm:$0xf] %v857
        %890 = vst [vmem:[%s250 + $0x20] sm:$0xf] %v858
        %891 = vst [vmem:[%s250 + $0x24] sm:$0xf] %v859
        %892 = vst [vmem:[%s250 + $0x28] sm:$0xf] %v860
        %893 = vst [vmem:[%s250 + $0x2c] sm:$0xf] %v861
        %894 = vst [vmem:[%s250 + $0x30] sm:$0xf] %v862
        %895 = vst [vmem:[%s250 + $0x34] sm:$0xf] %v863
        %896 = vst [vmem:[%s250 + $0x38] sm:$0xf] %v864
        %897 = vst [vmem:[%s250 + $0x3c] sm:$0xf] %v865
        %898 = vst [vmem:[%s250 + $0x40] sm:$0xf] %v866
        %899 = vst [vmem:[%s250 + $0x44] sm:$0xf] %v867
        %900 = vst [vmem:[%s250 + $0x48] sm:$0xf] %v868
        %901 = vst [vmem:[%s250 + $0x4c] sm:$0xf] %v869
        %902 = vst [vmem:[%s250 + $0x50] sm:$0xf] %v870
        %903 = vst [vmem:[%s250 + $0x54] sm:$0xf] %v871
        %904 = vst [vmem:[%s250 + $0x58] sm:$0xf] %v872
        %905 = vst [vmem:[%s250 + $0x5c] sm:$0xf] %v873
        %906 = vst [vmem:[%s250 + $0x60] sm:$0xf] %v874
        %907 = vst [vmem:[%s250 + $0x64] sm:$0xf] %v875
        %908 = vst [vmem:[%s250 + $0x68] sm:$0xf] %v876
        %909 = vst [vmem:[%s250 + $0x6c] sm:$0xf] %v877
        %910 = vst [vmem:[%s250 + $0x70] sm:$0xf] %v878
        %911 = vst [vmem:[%s250 + $0x74] sm:$0xf] %v879
        %912 = vst [vmem:[%s250 + $0x78] sm:$0xf] %v880
        %913 = vst [vmem:[%s250 + $0x7c] sm:$0xf] %v881
        %s914 = sand.u32 %s121, 1
        %s915 = scalar_lea.sflag [#allocation4], %s914
        %s916 = sand.u32 %s121, 1
        %s917 = smul.addr %s916, 128
        %s918 = scalar_lea.vmem [#allocation8], %s917
        // Predicated region
        $region45: #{tpu_custom_call.1} parent=31 // pred_check
          %p919 = pneg %p131
        $region46: #{tpu_custom_call.1} parent=31 // pred_check_branch
          %921 = sbr.rel (%p919) target = $region48
        $region47: #{tpu_custom_call.1} parent=31 // pred_region
          %s922 = smul.u32 32, %s25
          %924 = vsyncadd %s915, 0
          %s925 = sadd.s32 %s26, %s922
          %s926 = smul.addr %s925, 4
          %s927 = scalar_lea.hbm %s3, %s926
          %s928 = sshll.u32 %s918, 4
          %s929 = int_to_ptr.vmem [resolvable:$true] %s928
          %s930 = sshll.u32 %s927, 4
          %s931 = int_to_ptr.hbm [resolvable:$true] %s930
          %936 = dma.vmem_to_hbm [thread:$0]  %s929, 2048, %s931, %s915, 64, 64, 4
        $region48: #{tpu_custom_call.1} parent=31 // pred_fallthru
          _
      $region32: #{tpu_custom_call.1} parent=5 // pred_fallthru
        _
      %p937 = scmp.le.s32.totalorder 2, %s16
      // Predicated region
      $region49: #{tpu_custom_call.1} parent=5 // pred_check
        %p938 = pneg %p937
      $region50: #{tpu_custom_call.1} parent=5 // pred_check_branch
        %940 = sbr.rel (%p938) target = $region52
      $region51: #{tpu_custom_call.1} parent=5 // pred_region
        %s941 = ssub.s32 %s16, 2
        // Predicated region
        $region53: #{tpu_custom_call.1} parent=51 // pred_check
          %p942 = pneg %p137
        $region54: #{tpu_custom_call.1} parent=51 // pred_check_branch
          %944 = sbr.rel (%p942) target = $region56
        $region55: #{tpu_custom_call.1} parent=51 // pred_region
          %s945 = sand.u32 %s122, 1
          %s946 = scalar_lea.sflag [#allocation4], %s945
          %s947 = sand.u32 %s122, 1
          %s948 = smul.addr %s947, 128
          %s949 = scalar_lea.vmem [#allocation8], %s948
          %951 = dma.done %s946, 2048
        $region56: #{tpu_custom_call.1} parent=51 // pred_fallthru
          _
      $region52: #{tpu_custom_call.1} parent=5 // pred_fallthru
        _
    $region6: #{tpu_custom_call.1} parent=1 // loop_footer
      %s20 = sadd.s32 1, %s16
    $region7: #{tpu_custom_call.1} parent=1 // loop_footer_branch
      %15 = sbr.rel target = $region3
    $region8: #{tpu_custom_call.1} parent=1 // loop_exit
      _
    %952 = vsyncpa [#allocation3], 1
    %s953 = scalar_lea.sflag [#allocation3], 1
    %954 = vsyncpa %s953, 1
    %955 = vsyncpa [#allocation6], 1
    %956 = vsyncpa [#allocation4], 1
    %s957 = scalar_lea.sflag [#allocation4], 1
    %958 = vsyncpa %s957, 1

</llo_original>
